<compile_context>
chip_gen: v5e
topology: v5e:2x2
jax: 0.10.0
libtpu: 0.0.40
codegen_flags: <defaults>
</compile_context>

<pallas_src>
import jax
import jax.numpy as jnp
from jax.experimental import pallas as pl
from jax.experimental.pallas import tpu as pltpu


def linear_kernel(x_ref, w_ref, b_ref, o_ref):
    """One batch tile of y = x @ W.T + b, specialized to OUT == 1.

    x_ref: [IN, TB]  VMEM, lane-dense over the batch axis (IN on sublanes).
    w_ref: [1, IN]   SMEM (PyTorch layout), read as scalars.
    b_ref: [1]       SMEM scalar.
    o_ref: [1, TB]   VMEM, lane-dense output slab.
    """
    in_features = x_ref.shape[0]
    # Scalar (sreg) weight times lane-dense row: pure VPU work, fully unrolled
    # over the static IN = 10 contraction.
    acc = x_ref[pl.ds(0, 1), :] * w_ref[0, 0]
    for i in range(1, in_features):
        acc = acc + x_ref[pl.ds(i, 1), :] * w_ref[0, i]
    o_ref[...] = acc + b_ref[0]


def _pick_batch_tile(B):
    """Batch tile along the lane axis (multiple of 128).

    Lane-dense x blocks cost round_up(IN, 8) * TB * 4 bytes, double-buffered
    by the pipeline, so even MAX_TB = 32768 is ~4 MiB total — comfortably
    inside the scoped-VMEM defaults of v5e/v6e/v7x.  For large B we keep at
    least 2 grid steps so the "parallel" batch axis can shard across both
    TensorCores on v7x.
    """
    MAX_TB = 32768
    if B <= 2 * 128:
        return 128
    half = ((B + 1) // 2 + 127) // 128 * 128   # ceil(B/2) rounded up to 128
    return min(MAX_TB, half)


def simple_model_forward(x, weight, bias):
    """x: [B, IN] f32, weight: [OUT, IN] (PyTorch layout), bias: [OUT]."""
    B, IN = x.shape
    OUT = weight.shape[0]
    assert OUT == 1, "SimpleModel is nn.Linear(10, 1); kernel assumes OUT == 1"

    TB = _pick_batch_tile(B)
    nb = pl.cdiv(B, TB)
    B_pad = nb * TB

    # Lane-dense input layout: batch on the 128-lane axis, IN on sublanes.
    # Zero-padding the ragged tail keeps every grid step a full, pipelined
    # tile (padded columns compute b and are sliced off below).
    # TODO(synk): if x can be produced upstream directly as [IN, B], drop this
    # transpose/pad copy (it is the one extra HBM pass over x).
    x_t = jnp.zeros((IN, B_pad), x.dtype).at[:, :B].set(x.T)

    flops = 2 * B * IN * OUT
    bytes_accessed = 4 * (B * IN + OUT * IN + OUT + B * OUT)

    out = pl.pallas_call(
        linear_kernel,
        out_shape=jax.ShapeDtypeStruct((1, B_pad), jnp.float32),
        grid=(nb,),
        in_specs=[
            # x tile: full IN extent on sublanes, TB batch columns on lanes.
            pl.BlockSpec((IN, TB), lambda i: (0, i)),
            # weight [1, IN] and bias [1] live in SMEM, read as scalars.
            pl.BlockSpec(memory_space=pltpu.MemorySpace.SMEM),
            pl.BlockSpec(memory_space=pltpu.MemorySpace.SMEM),
        ],
        # Lane-dense output slab: unmasked vst, TB/128 stores per tile.
        out_specs=pl.BlockSpec((1, TB), lambda i: (0, i)),
        compiler_params=pltpu.CompilerParams(
            dimension_semantics=("parallel",),
        ),
        cost_estimate=pl.CostEstimate(
            flops=flops, transcendentals=0, bytes_accessed=bytes_accessed
        ),
    )(x_t, weight, bias)

    # Back to PyTorch [B, OUT] semantics.
    return out[0, :B].reshape(B, OUT)


if __name__ == "__main__":
    key = jax.random.PRNGKey(0)
    kx, kw, kb = jax.random.split(key, 3)

    B, IN, OUT = 8, 10, 1

    # Deterministic parameter init (mimics nn.Linear's uniform(-1/sqrt(IN), 1/sqrt(IN)))
    bound = 1.0 / (IN ** 0.5)
    weight = jax.random.uniform(kw, (OUT, IN), jnp.float32, -bound, bound)
    bias = jax.random.uniform(kb, (OUT,), jnp.float32, -bound, bound)

    x = jax.random.normal(kx, (B, IN), jnp.float32)

    y = simple_model_forward(x, weight, bias)
    jax.block_until_ready(y)

    # Verify against plain-JAX reference of the PyTorch forward: x @ W.T + b
    y_ref = x @ weight.T + bias
    assert y.shape == (B, OUT)
    assert jnp.allclose(y, y_ref, atol=1e-5, rtol=1e-5)

    print("KERNEL_OK")
</pallas_src>

<mosaic_0001>
module attributes {stable_mosaic.version = 11 : i64} {
  func.func @linear_kernel(%arg0: i32, %arg1: memref<10x128xf32, #tpu.memory_space<vmem>>, %arg2: memref<1x10xf32, #tpu.memory_space<smem>>, %arg3: memref<1xf32, #tpu.memory_space<smem>>, %arg4: memref<1x128xf32, #tpu.memory_space<vmem>>) attributes {dimension_semantics = [#tpu.dimension_semantics<parallel>], iteration_bounds = array<i64: 1>, scalar_prefetch = 0 : i64, scratch_operands = 0 : i64, tpu.core_type = #tpu.core_type<tc>, window_params = [{transform_indices = @transform_0, window_bounds = array<i64: 10, 128>}, {transform_indices = @transform_1, window_bounds = array<i64: 1, 10>}, {transform_indices = @transform_2, window_bounds = array<i64: 1>}, {transform_indices = @transform_3, window_bounds = array<i64: 1, 128>}]} {
    %c0 = arith.constant 0 : index
    %c0_0 = arith.constant 0 : index
    %0 = vector.load %arg1[%c0, %c0_0] : memref<10x128xf32, #tpu.memory_space<vmem>>, vector<1x128xf32>
    %c0_1 = arith.constant 0 : index
    %c0_2 = arith.constant 0 : index
    %1 = memref.load %arg2[%c0_1, %c0_2] : memref<1x10xf32, #tpu.memory_space<smem>>
    %2 = vector.broadcast %1 : f32 to vector<1x128xf32>
    %3 = arith.mulf %0, %2 : vector<1x128xf32>
    %c1 = arith.constant 1 : index
    %c0_3 = arith.constant 0 : index
    %4 = vector.load %arg1[%c1, %c0_3] : memref<10x128xf32, #tpu.memory_space<vmem>>, vector<1x128xf32>
    %c0_4 = arith.constant 0 : index
    %c1_5 = arith.constant 1 : index
    %5 = memref.load %arg2[%c0_4, %c1_5] : memref<1x10xf32, #tpu.memory_space<smem>>
    %6 = vector.broadcast %5 : f32 to vector<1x128xf32>
    %7 = arith.mulf %4, %6 : vector<1x128xf32>
    %8 = arith.addf %3, %7 : vector<1x128xf32>
    %c2 = arith.constant 2 : index
    %c0_6 = arith.constant 0 : index
    %9 = vector.load %arg1[%c2, %c0_6] : memref<10x128xf32, #tpu.memory_space<vmem>>, vector<1x128xf32>
    %c0_7 = arith.constant 0 : index
    %c2_8 = arith.constant 2 : index
    %10 = memref.load %arg2[%c0_7, %c2_8] : memref<1x10xf32, #tpu.memory_space<smem>>
    %11 = vector.broadcast %10 : f32 to vector<1x128xf32>
    %12 = arith.mulf %9, %11 : vector<1x128xf32>
    %13 = arith.addf %8, %12 : vector<1x128xf32>
    %c3 = arith.constant 3 : index
    %c0_9 = arith.constant 0 : index
    %14 = vector.load %arg1[%c3, %c0_9] : memref<10x128xf32, #tpu.memory_space<vmem>>, vector<1x128xf32>
    %c0_10 = arith.constant 0 : index
    %c3_11 = arith.constant 3 : index
    %15 = memref.load %arg2[%c0_10, %c3_11] : memref<1x10xf32, #tpu.memory_space<smem>>
    %16 = vector.broadcast %15 : f32 to vector<1x128xf32>
    %17 = arith.mulf %14, %16 : vector<1x128xf32>
    %18 = arith.addf %13, %17 : vector<1x128xf32>
    %c4 = arith.constant 4 : index
    %c0_12 = arith.constant 0 : index
    %19 = vector.load %arg1[%c4, %c0_12] : memref<10x128xf32, #tpu.memory_space<vmem>>, vector<1x128xf32>
    %c0_13 = arith.constant 0 : index
    %c4_14 = arith.constant 4 : index
    %20 = memref.load %arg2[%c0_13, %c4_14] : memref<1x10xf32, #tpu.memory_space<smem>>
    %21 = vector.broadcast %20 : f32 to vector<1x128xf32>
    %22 = arith.mulf %19, %21 : vector<1x128xf32>
    %23 = arith.addf %18, %22 : vector<1x128xf32>
    %c5 = arith.constant 5 : index
    %c0_15 = arith.constant 0 : index
    %24 = vector.load %arg1[%c5, %c0_15] : memref<10x128xf32, #tpu.memory_space<vmem>>, vector<1x128xf32>
    %c0_16 = arith.constant 0 : index
    %c5_17 = arith.constant 5 : index
    %25 = memref.load %arg2[%c0_16, %c5_17] : memref<1x10xf32, #tpu.memory_space<smem>>
    %26 = vector.broadcast %25 : f32 to vector<1x128xf32>
    %27 = arith.mulf %24, %26 : vector<1x128xf32>
    %28 = arith.addf %23, %27 : vector<1x128xf32>
    %c6 = arith.constant 6 : index
    %c0_18 = arith.constant 0 : index
    %29 = vector.load %arg1[%c6, %c0_18] : memref<10x128xf32, #tpu.memory_space<vmem>>, vector<1x128xf32>
    %c0_19 = arith.constant 0 : index
    %c6_20 = arith.constant 6 : index
    %30 = memref.load %arg2[%c0_19, %c6_20] : memref<1x10xf32, #tpu.memory_space<smem>>
    %31 = vector.broadcast %30 : f32 to vector<1x128xf32>
    %32 = arith.mulf %29, %31 : vector<1x128xf32>
    %33 = arith.addf %28, %32 : vector<1x128xf32>
    %c7 = arith.constant 7 : index
    %c0_21 = arith.constant 0 : index
    %34 = vector.load %arg1[%c7, %c0_21] : memref<10x128xf32, #tpu.memory_space<vmem>>, vector<1x128xf32>
    %c0_22 = arith.constant 0 : index
    %c7_23 = arith.constant 7 : index
    %35 = memref.load %arg2[%c0_22, %c7_23] : memref<1x10xf32, #tpu.memory_space<smem>>
    %36 = vector.broadcast %35 : f32 to vector<1x128xf32>
    %37 = arith.mulf %34, %36 : vector<1x128xf32>
    %38 = arith.addf %33, %37 : vector<1x128xf32>
    %c8 = arith.constant 8 : index
    %c0_24 = arith.constant 0 : index
    %39 = vector.load %arg1[%c8, %c0_24] : memref<10x128xf32, #tpu.memory_space<vmem>>, vector<1x128xf32>
    %c0_25 = arith.constant 0 : index
    %c8_26 = arith.constant 8 : index
    %40 = memref.load %arg2[%c0_25, %c8_26] : memref<1x10xf32, #tpu.memory_space<smem>>
    %41 = vector.broadcast %40 : f32 to vector<1x128xf32>
    %42 = arith.mulf %39, %41 : vector<1x128xf32>
    %43 = arith.addf %38, %42 : vector<1x128xf32>
    %c9 = arith.constant 9 : index
    %c0_27 = arith.constant 0 : index
    %44 = vector.load %arg1[%c9, %c0_27] : memref<10x128xf32, #tpu.memory_space<vmem>>, vector<1x128xf32>
    %c0_28 = arith.constant 0 : index
    %c9_29 = arith.constant 9 : index
    %45 = memref.load %arg2[%c0_28, %c9_29] : memref<1x10xf32, #tpu.memory_space<smem>>
    %46 = vector.broadcast %45 : f32 to vector<1x128xf32>
    %47 = arith.mulf %44, %46 : vector<1x128xf32>
    %48 = arith.addf %43, %47 : vector<1x128xf32>
    %c0_30 = arith.constant 0 : index
    %49 = memref.load %arg3[%c0_30] : memref<1xf32, #tpu.memory_space<smem>>
    %50 = vector.broadcast %49 : f32 to vector<1x128xf32>
    %51 = arith.addf %48, %50 : vector<1x128xf32>
    %c0_31 = arith.constant 0 : index
    %c0_32 = arith.constant 0 : index
    %52 = vector.load %arg4[%c0_31, %c0_32] : memref<1x128xf32, #tpu.memory_space<vmem>>, vector<1x128xf32>
    tpu.vector_store %arg4[%c0_31, %c0_32], %51 {strides = array<i32>} : memref<1x128xf32, #tpu.memory_space<vmem>>, vector<1x128xf32>,
    return
  }
  func.func @transform_0(%arg0: i32) -> (i32, i32) {
    %c0_i32 = arith.constant 0 : i32
    %c0_i32_0 = arith.constant 0 : i32
    return %c0_i32, %arg0 : i32, i32
  }
  func.func @transform_1(%arg0: i32) -> (i32, i32) {
    %c0_i32 = arith.constant 0 : i32
    %c0_i32_0 = arith.constant 0 : i32
    %c0_i32_1 = arith.constant 0 : i32
    return %c0_i32, %c0_i32_0 : i32, i32
  }
  func.func @transform_2(%arg0: i32) -> i32 {
    %c0_i32 = arith.constant 0 : i32
    %c0_i32_0 = arith.constant 0 : i32
    return %c0_i32 : i32
  }
  func.func @transform_3(%arg0: i32) -> (i32, i32) {
    %c0_i32 = arith.constant 0 : i32
    %c0_i32_0 = arith.constant 0 : i32
    return %c0_i32, %arg0 : i32, i32
  }
}

</mosaic_0001>

<llo_original>
// kernel: tpu_custom_call.1
$region0: #{tpu_custom_call.1}
  #allocation0 [shape = 'u32[]', space=smem, size = 0x4, offset = 0x4, fixed_abs, tag = 'smem constant byte address 0x4 - core index']
  #allocation1 [shape = 'u32[72,128]{1,0:T(1,128)}', space=vmem, size = 0x9000, scoped, tag = 'internal scratch']
  #allocation2 [shape = 'f32[1]{0:T(128)S(6)}', space=smem, size = 0x200, scoped, tag = 'scoped memory for tpu_custom_call.1']
  %s0 = inlined_call_operand.hbm [shape: f32[10,128], index: 0, kind: input, shape index: {}]
  %s1 = inlined_call_operand.vmem [shape: f32[1,10], index: 1, kind: input, shape index: {}]
  %s2 = inlined_call_operand.<no memory space> [shape: f32[1], index: 2, kind: input, shape index: {}]
  %s3 = inlined_call_operand.hbm [shape: f32[1,128], index: 3, kind: output, shape index: {}]
  %s4 = sld [smem:[#allocation0]]
  $region30: #{tpu_custom_call.1} parent=0
    _
  %s6 = ssub.s32 1, %s4
  %s7 = scalar_select 0, %s6, %s4
  %8 = sst [smem:[#allocation2]] %s2
  $region1: #{tpu_custom_call.1} parent=0
    #allocation3 [shape = 'u8[8192]{0}', space=vmem, size = 0x2000, scoped, tag = 'input window, operand 0, single buffered']
    #allocation4 [shape = 's32[1]{0}', space=sflag, size = 0x4, scoped, tag = 'scoped memory for tpu_custom_call.1']
    #allocation5 [shape = 's32[1]{0}', space=sflag, size = 0x4, scoped, tag = 'scoped memory for tpu_custom_call.1']
    #allocation6 [shape = 's32[1]{0}', space=sflag, size = 0x4, scoped, tag = 'scoped memory for tpu_custom_call.1']
    #allocation7 [shape = 'u8[512]{0}', space=smem, size = 0x200, scoped, tag = 'input window, operand 1, single buffered']
    #allocation8 [shape = 'u8[512]{0}', space=vmem, size = 0x400, scoped, tag = 'output window, operand 0, single buffered']
    %9 = vsyncpa [#allocation4], 0
    %10 = vsyncpa [#allocation6], 0
    %11 = vsyncpa [#allocation5], 0
    // Predicated region
    $region2: #{tpu_custom_call.1} parent=1 // pred_check
      _
    $region3: #{tpu_custom_call.1} parent=1 // pred_check_branch
      %13 = sbr.rel (0) target = $region5
    $region4: #{tpu_custom_call.1} parent=1 // pred_region
      %15 = vsyncadd [#allocation4], 0
      %s16 = sshll.u32 %s0, 4
      %s17 = int_to_ptr.hbm [resolvable:$true] %s16
      %s18 = sshll.u32 [#allocation3], 4
      %s19 = int_to_ptr.vmem [resolvable:$true] %s18
      %24 = dma.hbm_to_vmem [thread:$0]  %s17, 256, %s19, [#allocation4], 128, 128, 8
    $region5: #{tpu_custom_call.1} parent=1 // pred_fallthru
      _
    // Predicated region
    $region6: #{tpu_custom_call.1} parent=1 // pred_check
      _
    $region7: #{tpu_custom_call.1} parent=1 // pred_check_branch
      %26 = sbr.rel (0) target = $region9
    $region8: #{tpu_custom_call.1} parent=1 // pred_region
      %28 = vsyncadd [#allocation6], 0
      %s30 = sshll.u32 %s1, 4
      %s31 = int_to_ptr.vmem [resolvable:$true] %s30
      %33 = dma.vmem_to_smem %s31, 16, [#allocation7], [#allocation6]
    $region9: #{tpu_custom_call.1} parent=1 // pred_fallthru
      _
    // Predicated region
    $region10: #{tpu_custom_call.1} parent=1 // pred_check
      _
    $region11: #{tpu_custom_call.1} parent=1 // pred_check_branch
      %35 = sbr.rel (0) target = $region13
    $region12: #{tpu_custom_call.1} parent=1 // pred_region
      _
    $region13: #{tpu_custom_call.1} parent=1 // pred_fallthru
      _
    // Predicated region
    $region14: #{tpu_custom_call.1} parent=1 // pred_check
      _
    $region15: #{tpu_custom_call.1} parent=1 // pred_check_branch
      %37 = sbr.rel (0) target = $region17
    $region16: #{tpu_custom_call.1} parent=1 // pred_region
      %39 = dma.done [#allocation4], 256
    $region17: #{tpu_custom_call.1} parent=1 // pred_fallthru
      _
    // Predicated region
    $region18: #{tpu_custom_call.1} parent=1 // pred_check
      _
    $region19: #{tpu_custom_call.1} parent=1 // pred_check_branch
      %41 = sbr.rel (0) target = $region21
    $region20: #{tpu_custom_call.1} parent=1 // pred_region
      %43 = dma.done [#allocation6], 16
    $region21: #{tpu_custom_call.1} parent=1 // pred_fallthru
      _
    %44 = sfence
    %v45 = vld [vmem:[#allocation3] sm:$0x1]
    %s46 = sld [smem:[#allocation7]]
    %v47 = vstv %s46
    %v48 = vmul.f32 %v45, %v47
    %v49 = vld [vmem:[#allocation3 + $0x1] sm:$0x1]
    %s50 = sld [smem:[#allocation7 + $0x1]]
    %v51 = vstv %s50
    %v52 = vmul.f32 %v49, %v51
    %v53 = vadd.f32 %v48, %v52
    %v54 = vld [vmem:[#allocation3 + $0x2] sm:$0x1]
    %s55 = sld [smem:[#allocation7 + $0x2]]
    %v56 = vstv %s55
    %v57 = vmul.f32 %v54, %v56
    %v58 = vadd.f32 %v53, %v57
    %v59 = vld [vmem:[#allocation3 + $0x3] sm:$0x1]
    %s60 = sld [smem:[#allocation7 + $0x3]]
    %v61 = vstv %s60
    %v62 = vmul.f32 %v59, %v61
    %v63 = vadd.f32 %v58, %v62
    %v64 = vld [vmem:[#allocation3 + $0x4] sm:$0x1]
    %s65 = sld [smem:[#allocation7 + $0x4]]
    %v66 = vstv %s65
    %v67 = vmul.f32 %v64, %v66
    %v68 = vadd.f32 %v63, %v67
    %v69 = vld [vmem:[#allocation3 + $0x5] sm:$0x1]
    %s70 = sld [smem:[#allocation7 + $0x5]]
    %v71 = vstv %s70
    %v72 = vmul.f32 %v69, %v71
    %v73 = vadd.f32 %v68, %v72
    %v74 = vld [vmem:[#allocation3 + $0x6] sm:$0x1]
    %s75 = sld [smem:[#allocation7 + $0x6]]
    %v76 = vstv %s75
    %v77 = vmul.f32 %v74, %v76
    %v78 = vadd.f32 %v73, %v77
    %v79 = vld [vmem:[#allocation3 + $0x7] sm:$0x1]
    %s80 = sld [smem:[#allocation7 + $0x7]]
    %v81 = vstv %s80
    %v82 = vmul.f32 %v79, %v81
    %v83 = vadd.f32 %v78, %v82
    %v84 = vld [vmem:[#allocation3 + $0x8] sm:$0x1]
    %s85 = sld [smem:[#allocation7 + $0x8]]
    %v86 = vstv %s85
    %v87 = vmul.f32 %v84, %v86
    %v88 = vadd.f32 %v83, %v87
    %v89 = vld [vmem:[#allocation3 + $0x9] sm:$0x1]
    %s90 = sld [smem:[#allocation7 + $0x9]]
    %v91 = vstv %s90
    %v92 = vmul.f32 %v89, %v91
    %v93 = vadd.f32 %v88, %v92
    %s94 = sld [smem:[#allocation2]]
    %v95 = vstv %s94
    %v96 = vadd.f32 %v93, %v95
    %97 = vst [vmem:[#allocation8] sm:$0x1] %v96
    // Predicated region
    $region22: #{tpu_custom_call.1} parent=1 // pred_check
      _
    $region23: #{tpu_custom_call.1} parent=1 // pred_check_branch
      %99 = sbr.rel (0) target = $region25
    $region24: #{tpu_custom_call.1} parent=1 // pred_region
      %101 = vsyncadd [#allocation5], 0
      %s103 = sshll.u32 [#allocation8], 4
      %s104 = int_to_ptr.vmem [resolvable:$true] %s103
      %s105 = sshll.u32 %s3, 4
      %s106 = int_to_ptr.hbm [resolvable:$true] %s105
      %108 = dma.vmem_to_hbm [thread:$0]  %s104, 16, %s106, [#allocation5]
    $region25: #{tpu_custom_call.1} parent=1 // pred_fallthru
      _
    // Predicated region
    $region26: #{tpu_custom_call.1} parent=1 // pred_check
      _
    $region27: #{tpu_custom_call.1} parent=1 // pred_check_branch
      %110 = sbr.rel (0) target = $region29
    $region28: #{tpu_custom_call.1} parent=1 // pred_region
      %112 = dma.done [#allocation5], 16
    $region29: #{tpu_custom_call.1} parent=1 // pred_fallthru
      _
    %113 = vsyncpa [#allocation4], 1
    %114 = vsyncpa [#allocation5], 1
    %115 = vsyncpa [#allocation6], 1

</llo_original>
